<compile_context>
chip_gen: v6e
topology: v6e:2x2x1
jax: 0.10.0
libtpu: 0.0.40
codegen_flags: <defaults>
</compile_context>

<pallas_src>
import functools

import jax
import jax.numpy as jnp
from jax.experimental import pallas as pl
from jax.experimental.pallas import tpu as pltpu


def _round_up(n: int, m: int) -> int:
    return ((n + m - 1) // m) * m


def _dqn_kernel(x_ref, w1_ref, b1_ref, w2_ref, b2_ref, w3_ref, b3_ref, o_ref):
    # Three MXU matmuls (compute dtype = weight dtype, f32 accumulation)
    # + VPU bias-add / ReLU in f32, fused into one kernel body per batch tile.
    cdt = w1_ref.dtype
    x = x_ref[...].astype(cdt)

    h1 = jnp.dot(x, w1_ref[...], preferred_element_type=jnp.float32) + b1_ref[...]
    h1 = jnp.maximum(h1, 0.0).astype(cdt)

    h2 = jnp.dot(h1, w2_ref[...], preferred_element_type=jnp.float32) + b2_ref[...]
    h2 = jnp.maximum(h2, 0.0).astype(cdt)

    out = jnp.dot(h2, w3_ref[...], preferred_element_type=jnp.float32) + b3_ref[...]
    o_ref[...] = out.astype(o_ref.dtype)


@functools.partial(jax.jit, static_argnames=("compute_dtype", "tb"))
def dqn_forward(x, params, *, compute_dtype=jnp.bfloat16, tb=None):
    """Fused DQN forward. x: (B, input_dim) f32. Returns (B, output_dim) f32."""
    w1, b1, w2, b2, w3, b3 = params
    B, in_dim = x.shape
    hidden = w1.shape[1]
    out_dim = w3.shape[1]

    # Lane-dense feature dims (multiples of 128) -> unmasked vst, full MXU tiles.
    in_pad = _round_up(in_dim, 128)
    out_pad = _round_up(out_dim, 128)

    # Batch tile: MXU-M aligned (256) when the batch is big enough, otherwise
    # the smallest multiple of 8 covering B (satisfies the (8,128) constraint).
    if tb is None:
        tb = 256 if B >= 256 else _round_up(max(B, 8), 8)
    b_pad = _round_up(B, tb)
    grid = (b_pad // tb,)

    # Zero-pad: extra K rows / N cols of the weights contribute nothing, extra
    # batch rows compute garbage that is sliced off below.
    xp = jnp.zeros((b_pad, in_pad), jnp.float32).at[:B, :in_dim].set(
        x.astype(jnp.float32))
    w1p = jnp.zeros((in_pad, hidden), compute_dtype).at[:in_dim, :].set(
        w1.astype(compute_dtype))
    w2p = w2.astype(compute_dtype)
    w3p = jnp.zeros((hidden, out_pad), compute_dtype).at[:, :out_dim].set(
        w3.astype(compute_dtype))
    b1p = b1.astype(jnp.float32)
    b2p = b2.astype(jnp.float32)
    b3p = jnp.zeros((1, out_pad), jnp.float32).at[:, :out_dim].set(
        b3.astype(jnp.float32))

    wbytes = jnp.dtype(compute_dtype).itemsize
    flops = 2 * b_pad * (in_pad * hidden + hidden * hidden + hidden * out_pad)
    bytes_accessed = (
        b_pad * in_pad * 4 + b_pad * out_pad * 4
        + (in_pad * hidden + hidden * hidden + hidden * out_pad) * wbytes
        + (2 * hidden + out_pad) * 4)

    resident = lambda i: (0, 0)  # weights/biases stay in VMEM across the grid

    out = pl.pallas_call(
        _dqn_kernel,
        out_shape=jax.ShapeDtypeStruct((b_pad, out_pad), jnp.float32),
        grid_spec=pltpu.PrefetchScalarGridSpec(
            num_scalar_prefetch=0,
            grid=grid,
            in_specs=[
                pl.BlockSpec((tb, in_pad), lambda i: (i, 0)),      # x tile
                pl.BlockSpec((in_pad, hidden), resident),          # w1
                pl.BlockSpec((1, hidden), resident),               # b1
                pl.BlockSpec((hidden, hidden), resident),          # w2
                pl.BlockSpec((1, hidden), resident),               # b2
                pl.BlockSpec((hidden, out_pad), resident),         # w3
                pl.BlockSpec((1, out_pad), resident),              # b3
            ],
            out_specs=pl.BlockSpec((tb, out_pad), lambda i: (i, 0)),
        ),
        compiler_params=pltpu.CompilerParams(
            dimension_semantics=(pltpu.PARALLEL,),   # v7x: shard batch tiles across 2 TCs
            vmem_limit_bytes=32 * 1024 * 1024,       # few MiB needed; safe on v5e/v6e/v7x
        ),
        cost_estimate=pl.CostEstimate(
            flops=flops, transcendentals=0, bytes_accessed=bytes_accessed),
    )(xp, w1p, b1p, w2p, b2p, w3p, b3p)

    return out[:B, :out_dim]


def init_dqn_params(key, input_dim, output_dim, hidden=128):
    """Deterministic init; shapes mirror torch.nn.Linear (stored transposed)."""
    ks = jax.random.split(key, 6)

    def uniform(k, shape, fan_in):
        bound = 1.0 / jnp.sqrt(jnp.float32(fan_in))
        return jax.random.uniform(k, shape, jnp.float32, -bound, bound)

    w1 = uniform(ks[0], (input_dim, hidden), input_dim)
    b1 = uniform(ks[1], (1, hidden), input_dim)
    w2 = uniform(ks[2], (hidden, hidden), hidden)
    b2 = uniform(ks[3], (1, hidden), hidden)
    w3 = uniform(ks[4], (hidden, output_dim), hidden)
    b3 = uniform(ks[5], (1, output_dim), hidden)
    return (w1, b1, w2, b2, w3, b3)


def dqn_reference(x, params):
    w1, b1, w2, b2, w3, b3 = params
    h1 = jnp.maximum(x @ w1 + b1, 0.0)
    h2 = jnp.maximum(h1 @ w2 + b2, 0.0)
    return h2 @ w3 + b3


if __name__ == "__main__":
    key = jax.random.PRNGKey(0)
    k_param, k_x, k_x2 = jax.random.split(key, 3)

    batch, input_dim, output_dim = 8, 32, 4
    params = init_dqn_params(k_param, input_dim, output_dim)
    x = jax.random.normal(k_x, (batch, input_dim), dtype=jnp.float32)
    ref = dqn_reference(x, params)

    # f32 compute path: exact (padding with zeros is lossless).
    out_f32 = jax.block_until_ready(
        dqn_forward(x, params, compute_dtype=jnp.float32))
    assert out_f32.shape == (batch, output_dim)
    assert jnp.allclose(out_f32, ref, atol=1e-4, rtol=1e-4)

    # bf16-operand / f32-accumulate path (default): RL-level tolerance.
    out_bf16 = jax.block_until_ready(dqn_forward(x, params))
    assert out_bf16.shape == (batch, output_dim)
    assert jnp.allclose(out_bf16, ref, atol=5e-2, rtol=5e-2)

    # Larger, non-tile-aligned batch exercises the tiled grid + padding path.
    x_big = jax.random.normal(k_x2, (500, input_dim), dtype=jnp.float32)
    out_big = jax.block_until_ready(
        dqn_forward(x_big, params, compute_dtype=jnp.float32))
    assert out_big.shape == (500, output_dim)
    assert jnp.allclose(out_big, dqn_reference(x_big, params),
                        atol=1e-4, rtol=1e-4)

    print("KERNEL_OK")
</pallas_src>

<mosaic_0001>
module attributes {stable_mosaic.version = 11 : i64} {
  func.func @_dqn_kernel(%arg0: i32, %arg1: memref<8x128xf32, #tpu.memory_space<vmem>>, %arg2: memref<128x128xf32, #tpu.memory_space<vmem>>, %arg3: memref<1x128xf32, #tpu.memory_space<vmem>>, %arg4: memref<128x128xf32, #tpu.memory_space<vmem>>, %arg5: memref<1x128xf32, #tpu.memory_space<vmem>>, %arg6: memref<128x128xf32, #tpu.memory_space<vmem>>, %arg7: memref<1x128xf32, #tpu.memory_space<vmem>>, %arg8: memref<8x128xf32, #tpu.memory_space<vmem>>) attributes {dimension_semantics = [#tpu.dimension_semantics<parallel>], iteration_bounds = array<i64: 1>, scalar_prefetch = 0 : i64, scratch_operands = 0 : i64, tpu.core_type = #tpu.core_type<tc>, window_params = [{transform_indices = @transform_0, window_bounds = array<i64: 8, 128>}, {pipeline_mode = #tpu.pipeline_mode<synchronous>, transform_indices = @transform_1, window_bounds = array<i64: 128, 128>}, {pipeline_mode = #tpu.pipeline_mode<synchronous>, transform_indices = @transform_2, window_bounds = array<i64: 1, 128>}, {pipeline_mode = #tpu.pipeline_mode<synchronous>, transform_indices = @transform_3, window_bounds = array<i64: 128, 128>}, {pipeline_mode = #tpu.pipeline_mode<synchronous>, transform_indices = @transform_4, window_bounds = array<i64: 1, 128>}, {pipeline_mode = #tpu.pipeline_mode<synchronous>, transform_indices = @transform_5, window_bounds = array<i64: 128, 128>}, {pipeline_mode = #tpu.pipeline_mode<synchronous>, transform_indices = @transform_6, window_bounds = array<i64: 1, 128>}, {transform_indices = @transform_7, window_bounds = array<i64: 8, 128>}]} {
    %c0 = arith.constant 0 : index
    %c0_0 = arith.constant 0 : index
    %0 = vector.load %arg1[%c0, %c0_0] : memref<8x128xf32, #tpu.memory_space<vmem>>, vector<8x128xf32>
    %c0_1 = arith.constant 0 : index
    %c0_2 = arith.constant 0 : index
    %1 = vector.load %arg2[%c0_1, %c0_2] : memref<128x128xf32, #tpu.memory_space<vmem>>, vector<128x128xf32>
    %cst = arith.constant dense<0.000000e+00> : vector<8x128xf32>
    %2 = tpu.matmul %0, %1, %cst {dimension_numbers = #tpu.dot_dimension_numbers<[1], [0], [0], [1], [0, 0, 1, 1], [], []>} : vector<8x128xf32>, vector<128x128xf32>, vector<8x128xf32> -> vector<8x128xf32>
    %c0_3 = arith.constant 0 : index
    %c0_4 = arith.constant 0 : index
    %3 = vector.load %arg3[%c0_3, %c0_4] : memref<1x128xf32, #tpu.memory_space<vmem>>, vector<1x128xf32>
    %4 = vector.broadcast %3 : vector<1x128xf32> to vector<8x128xf32>
    %5 = arith.addf %2, %4 : vector<8x128xf32>
    %cst_5 = arith.constant 0.000000e+00 : f32
    %6 = vector.broadcast %cst_5 : f32 to vector<8x128xf32>
    %7 = arith.maximumf %5, %6 : vector<8x128xf32>
    %c0_6 = arith.constant 0 : index
    %c0_7 = arith.constant 0 : index
    %8 = vector.load %arg4[%c0_6, %c0_7] : memref<128x128xf32, #tpu.memory_space<vmem>>, vector<128x128xf32>
    %cst_8 = arith.constant dense<0.000000e+00> : vector<8x128xf32>
    %9 = tpu.matmul %7, %8, %cst_8 {dimension_numbers = #tpu.dot_dimension_numbers<[1], [0], [0], [1], [0, 0, 1, 1], [], []>} : vector<8x128xf32>, vector<128x128xf32>, vector<8x128xf32> -> vector<8x128xf32>
    %c0_9 = arith.constant 0 : index
    %c0_10 = arith.constant 0 : index
    %10 = vector.load %arg5[%c0_9, %c0_10] : memref<1x128xf32, #tpu.memory_space<vmem>>, vector<1x128xf32>
    %11 = vector.broadcast %10 : vector<1x128xf32> to vector<8x128xf32>
    %12 = arith.addf %9, %11 : vector<8x128xf32>
    %cst_11 = arith.constant 0.000000e+00 : f32
    %13 = vector.broadcast %cst_11 : f32 to vector<8x128xf32>
    %14 = arith.maximumf %12, %13 : vector<8x128xf32>
    %c0_12 = arith.constant 0 : index
    %c0_13 = arith.constant 0 : index
    %15 = vector.load %arg6[%c0_12, %c0_13] : memref<128x128xf32, #tpu.memory_space<vmem>>, vector<128x128xf32>
    %cst_14 = arith.constant dense<0.000000e+00> : vector<8x128xf32>
    %16 = tpu.matmul %14, %15, %cst_14 {dimension_numbers = #tpu.dot_dimension_numbers<[1], [0], [0], [1], [0, 0, 1, 1], [], []>} : vector<8x128xf32>, vector<128x128xf32>, vector<8x128xf32> -> vector<8x128xf32>
    %c0_15 = arith.constant 0 : index
    %c0_16 = arith.constant 0 : index
    %17 = vector.load %arg7[%c0_15, %c0_16] : memref<1x128xf32, #tpu.memory_space<vmem>>, vector<1x128xf32>
    %18 = vector.broadcast %17 : vector<1x128xf32> to vector<8x128xf32>
    %19 = arith.addf %16, %18 : vector<8x128xf32>
    %c0_17 = arith.constant 0 : index
    %c0_18 = arith.constant 0 : index
    %20 = vector.load %arg8[%c0_17, %c0_18] : memref<8x128xf32, #tpu.memory_space<vmem>>, vector<8x128xf32>
    tpu.vector_store %arg8[%c0_17, %c0_18], %19 {strides = array<i32>} : memref<8x128xf32, #tpu.memory_space<vmem>>, vector<8x128xf32>,
    return
  }
  func.func @transform_0(%arg0: i32) -> (i32, i32) {
    %c0_i32 = arith.constant 0 : i32
    %c0_i32_0 = arith.constant 0 : i32
    return %arg0, %c0_i32 : i32, i32
  }
  func.func @transform_1(%arg0: i32) -> (i32, i32) {
    %c0_i32 = arith.constant 0 : i32
    %c0_i32_0 = arith.constant 0 : i32
    %c0_i32_1 = arith.constant 0 : i32
    return %c0_i32, %c0_i32_0 : i32, i32
  }
  func.func @transform_2(%arg0: i32) -> (i32, i32) {
    %c0_i32 = arith.constant 0 : i32
    %c0_i32_0 = arith.constant 0 : i32
    %c0_i32_1 = arith.constant 0 : i32
    return %c0_i32, %c0_i32_0 : i32, i32
  }
  func.func @transform_3(%arg0: i32) -> (i32, i32) {
    %c0_i32 = arith.constant 0 : i32
    %c0_i32_0 = arith.constant 0 : i32
    %c0_i32_1 = arith.constant 0 : i32
    return %c0_i32, %c0_i32_0 : i32, i32
  }
  func.func @transform_4(%arg0: i32) -> (i32, i32) {
    %c0_i32 = arith.constant 0 : i32
    %c0_i32_0 = arith.constant 0 : i32
    %c0_i32_1 = arith.constant 0 : i32
    return %c0_i32, %c0_i32_0 : i32, i32
  }
  func.func @transform_5(%arg0: i32) -> (i32, i32) {
    %c0_i32 = arith.constant 0 : i32
    %c0_i32_0 = arith.constant 0 : i32
    %c0_i32_1 = arith.constant 0 : i32
    return %c0_i32, %c0_i32_0 : i32, i32
  }
  func.func @transform_6(%arg0: i32) -> (i32, i32) {
    %c0_i32 = arith.constant 0 : i32
    %c0_i32_0 = arith.constant 0 : i32
    %c0_i32_1 = arith.constant 0 : i32
    return %c0_i32, %c0_i32_0 : i32, i32
  }
  func.func @transform_7(%arg0: i32) -> (i32, i32) {
    %c0_i32 = arith.constant 0 : i32
    %c0_i32_0 = arith.constant 0 : i32
    return %arg0, %c0_i32 : i32, i32
  }
}

</mosaic_0001>

<llo_original>
// kernel: dqn_forward.1
$region0: #{dqn_forward.1}
  #allocation0 [shape = 'u32[]', space=smem, size = 0x4, offset = 0x4, fixed_abs, tag = 'smem constant byte address 0x4 - core index']
  #allocation1 [shape = 'u32[144,128]{1,0:T(1,128)}', space=vmem, size = 0x12000, scoped, tag = 'internal scratch']
  %s0 = inlined_call_operand.vmem [shape: f32[8,128], index: 0, kind: input, shape index: {}]
  %s1 = inlined_call_operand.vmem [shape: f32[128,128], index: 1, kind: input, shape index: {}]
  %s2 = inlined_call_operand.vmem [shape: f32[1,128], index: 2, kind: input, shape index: {}]
  %s3 = inlined_call_operand.vmem [shape: f32[128,128], index: 3, kind: input, shape index: {}]
  %s4 = inlined_call_operand.vmem [shape: f32[1,128], index: 4, kind: input, shape index: {}]
  %s5 = inlined_call_operand.vmem [shape: f32[128,128], index: 5, kind: input, shape index: {}]
  %s6 = inlined_call_operand.vmem [shape: f32[1,128], index: 6, kind: input, shape index: {}]
  %s7 = inlined_call_operand.vmem [shape: f32[8,128], index: 7, kind: output, shape index: {}]
  %s8 = sld [smem:[#allocation0]]
  $region38: #{dqn_forward.1} parent=0
    _
  %s10 = ssub.s32 1, %s8
  %s11 = scalar_select 0, %s10, %s8
  // Predicated region
  $region2: #{dqn_forward.1} parent=0 // pred_check
    _
  $region3: #{dqn_forward.1} parent=0 // pred_check_branch
    %13 = sbr.rel (0) target = $region5
  $region4: #{dqn_forward.1} parent=0 // pred_region
    _
  $region5: #{dqn_forward.1} parent=0 // pred_fallthru
    _
  // Predicated region
  $region6: #{dqn_forward.1} parent=0 // pred_check
    _
  $region7: #{dqn_forward.1} parent=0 // pred_check_branch
    %15 = sbr.rel (0) target = $region9
  $region8: #{dqn_forward.1} parent=0 // pred_region
    _
  $region9: #{dqn_forward.1} parent=0 // pred_fallthru
    _
  // Predicated region
  $region10: #{dqn_forward.1} parent=0 // pred_check
    _
  $region11: #{dqn_forward.1} parent=0 // pred_check_branch
    %17 = sbr.rel (0) target = $region13
  $region12: #{dqn_forward.1} parent=0 // pred_region
    _
  $region13: #{dqn_forward.1} parent=0 // pred_fallthru
    _
  // Predicated region
  $region14: #{dqn_forward.1} parent=0 // pred_check
    _
  $region15: #{dqn_forward.1} parent=0 // pred_check_branch
    %19 = sbr.rel (0) target = $region17
  $region16: #{dqn_forward.1} parent=0 // pred_region
    _
  $region17: #{dqn_forward.1} parent=0 // pred_fallthru
    _
  // Predicated region
  $region18: #{dqn_forward.1} parent=0 // pred_check
    _
  $region19: #{dqn_forward.1} parent=0 // pred_check_branch
    %21 = sbr.rel (0) target = $region21
  $region20: #{dqn_forward.1} parent=0 // pred_region
    _
  $region21: #{dqn_forward.1} parent=0 // pred_fallthru
    _
  // Predicated region
  $region22: #{dqn_forward.1} parent=0 // pred_check
    _
  $region23: #{dqn_forward.1} parent=0 // pred_check_branch
    %23 = sbr.rel (0) target = $region25
  $region24: #{dqn_forward.1} parent=0 // pred_region
    _
  $region25: #{dqn_forward.1} parent=0 // pred_fallthru
    _
  // Predicated region
  $region26: #{dqn_forward.1} parent=0 // pred_check
    _
  $region27: #{dqn_forward.1} parent=0 // pred_check_branch
    %25 = sbr.rel (0) target = $region29
  $region28: #{dqn_forward.1} parent=0 // pred_region
    _
  $region29: #{dqn_forward.1} parent=0 // pred_fallthru
    _
  %v26 = vld [vmem:[%s0] sm:$0xff]
  %v27 = vld [vmem:[%s1] sm:$0xff]
  %v28 = vld [vmem:[%s1 + $0x8] sm:$0xff]
  %v29 = vld [vmem:[%s1 + $0x10] sm:$0xff]
  %v30 = vld [vmem:[%s1 + $0x18] sm:$0xff]
  %v31 = vld [vmem:[%s1 + $0x20] sm:$0xff]
  %v32 = vld [vmem:[%s1 + $0x28] sm:$0xff]
  %v33 = vld [vmem:[%s1 + $0x30] sm:$0xff]
  %v34 = vld [vmem:[%s1 + $0x38] sm:$0xff]
  %v35 = vld [vmem:[%s1 + $0x40] sm:$0xff]
  %v36 = vld [vmem:[%s1 + $0x48] sm:$0xff]
  %v37 = vld [vmem:[%s1 + $0x50] sm:$0xff]
  %v38 = vld [vmem:[%s1 + $0x58] sm:$0xff]
  %v39 = vld [vmem:[%s1 + $0x60] sm:$0xff]
  %v40 = vld [vmem:[%s1 + $0x68] sm:$0xff]
  %v41 = vld [vmem:[%s1 + $0x70] sm:$0xff]
  %v42 = vld [vmem:[%s1 + $0x78] sm:$0xff]
  %v43 = vld [vmem:[%s2] sm:$0x1]
  %v45 = vlaneseq
  %v46 = vshrl.u32 %v45, 7
  %v47 = vsub.s32 0, %v46
  %v48 = vrot.slane %v43, %v47
  %50 = vmatprep.subr.mxu0 0.0
  %51 = vmatpush1.msra.mxu0 %v42
  %52 = vmatprep.subr.mxu0 0.0
  %53 = vmatpush1.msra.mxu0 %v41
  %54 = vmatprep.subr.mxu0 0.0
  %55 = vmatpush1.msra.mxu0 %v40
  %56 = vmatprep.subr.mxu0 0.0
  %57 = vmatpush1.msra.mxu0 %v39
  %58 = vmatprep.subr.mxu0 0.0
  %59 = vmatpush1.msra.mxu0 %v38
  %60 = vmatprep.subr.mxu0 0.0
  %61 = vmatpush1.msra.mxu0 %v37
  %62 = vmatprep.subr.mxu0 0.0
  %63 = vmatpush1.msra.mxu0 %v36
  %64 = vmatprep.subr.mxu0 0.0
  %65 = vmatpush1.msra.mxu0 %v35
  %66 = vmatprep.subr.mxu0 0.0
  %67 = vmatpush1.msra.mxu0 %v34
  %68 = vmatprep.subr.mxu0 0.0
  %69 = vmatpush1.msra.mxu0 %v33
  %70 = vmatprep.subr.mxu0 0.0
  %71 = vmatpush1.msra.mxu0 %v32
  %72 = vmatprep.subr.mxu0 0.0
  %73 = vmatpush1.msra.mxu0 %v31
  %74 = vmatprep.subr.mxu0 0.0
  %75 = vmatpush1.msra.mxu0 %v30
  %76 = vmatprep.subr.mxu0 0.0
  %77 = vmatpush1.msra.mxu0 %v29
  %78 = vmatprep.subr.mxu0 0.0
  %79 = vmatpush1.msra.mxu0 %v28
  %80 = vmatprep.subr.mxu0 0.0
  %81 = vmatpush1.msra.mxu0 %v27
  %82 = vmatprep.subr.mxu0 0.0
  %83 = vmatpush2.msra.mxu0 0.0
  %84 = vmatprep.subr.mxu0 0.0
  %85 = vmatpush2.msra.mxu0 0.0
  %86 = vmatprep.subr.mxu0 0.0
  %87 = vmatpush2.msra.mxu0 0.0
  %88 = vmatprep.subr.mxu0 0.0
  %89 = vmatpush2.msra.mxu0 0.0
  %90 = vmatprep.subr.mxu0 0.0
  %91 = vmatpush2.msra.mxu0 0.0
  %92 = vmatprep.subr.mxu0 0.0
  %93 = vmatpush2.msra.mxu0 0.0
  %94 = vmatprep.subr.mxu0 0.0
  %95 = vmatpush2.msra.mxu0 0.0
  %96 = vmatprep.subr.mxu0 0.0
  %97 = vmatpush2.msra.mxu0 0.0
  %98 = vmatprep.subr.mxu0 0.0
  %99 = vmatpush2.msra.mxu0 0.0
  %100 = vmatprep.subr.mxu0 0.0
  %101 = vmatpush2.msra.mxu0 0.0
  %102 = vmatprep.subr.mxu0 0.0
  %103 = vmatpush2.msra.mxu0 0.0
  %104 = vmatprep.subr.mxu0 0.0
  %105 = vmatpush2.msra.mxu0 0.0
  %106 = vmatprep.subr.mxu0 0.0
  %107 = vmatpush2.msra.mxu0 0.0
  %108 = vmatprep.subr.mxu0 0.0
  %109 = vmatpush2.msra.mxu0 0.0
  %110 = vmatprep.subr.mxu0 0.0
  %111 = vmatpush2.msra.mxu0 0.0
  %112 = vmatprep.subr.mxu0 0.0
  %113 = vmatpush2.msra.mxu0 0.0
  %114 = vmatprep.mubr.f32.mxu0 0.0
  %115 = vmatmul.mubr.f32.gmra.mxu0 %v26
  %v116 = vpop.f32.mrf.mxu0
  %v117 = vadd.f32 %v48, %v116
  %v118 = vpop.f32.mrf.mxu0
  %119 = vdwg.mxu0
  %v120 = vmax.f32 %v117, 0.0
  %v121 = vld [vmem:[%s3] sm:$0xff]
  %v122 = vld [vmem:[%s3 + $0x8] sm:$0xff]
  %v123 = vld [vmem:[%s3 + $0x10] sm:$0xff]
  %v124 = vld [vmem:[%s3 + $0x18] sm:$0xff]
  %v125 = vld [vmem:[%s3 + $0x20] sm:$0xff]
  %v126 = vld [vmem:[%s3 + $0x28] sm:$0xff]
  %v127 = vld [vmem:[%s3 + $0x30] sm:$0xff]
  %v128 = vld [vmem:[%s3 + $0x38] sm:$0xff]
  %v129 = vld [vmem:[%s3 + $0x40] sm:$0xff]
  %v130 = vld [vmem:[%s3 + $0x48] sm:$0xff]
  %v131 = vld [vmem:[%s3 + $0x50] sm:$0xff]
  %v132 = vld [vmem:[%s3 + $0x58] sm:$0xff]
  %v133 = vld [vmem:[%s3 + $0x60] sm:$0xff]
  %v134 = vld [vmem:[%s3 + $0x68] sm:$0xff]
  %v135 = vld [vmem:[%s3 + $0x70] sm:$0xff]
  %v136 = vld [vmem:[%s3 + $0x78] sm:$0xff]
  %v137 = vld [vmem:[%s4] sm:$0x1]
  %v139 = vlaneseq
  %v140 = vshrl.u32 %v139, 7
  %v141 = vsub.s32 0, %v140
  %v142 = vrot.slane %v137, %v141
  %144 = vmatprep.subr.mxu0 0.0
  %145 = vmatpush1.msra.mxu0 %v136
  %146 = vmatprep.subr.mxu0 0.0
  %147 = vmatpush1.msra.mxu0 %v135
  %148 = vmatprep.subr.mxu0 0.0
  %149 = vmatpush1.msra.mxu0 %v134
  %150 = vmatprep.subr.mxu0 0.0
  %151 = vmatpush1.msra.mxu0 %v133
  %152 = vmatprep.subr.mxu0 0.0
  %153 = vmatpush1.msra.mxu0 %v132
  %154 = vmatprep.subr.mxu0 0.0
  %155 = vmatpush1.msra.mxu0 %v131
  %156 = vmatprep.subr.mxu0 0.0
  %157 = vmatpush1.msra.mxu0 %v130
  %158 = vmatprep.subr.mxu0 0.0
  %159 = vmatpush1.msra.mxu0 %v129
  %160 = vmatprep.subr.mxu0 0.0
  %161 = vmatpush1.msra.mxu0 %v128
  %162 = vmatprep.subr.mxu0 0.0
  %163 = vmatpush1.msra.mxu0 %v127
  %164 = vmatprep.subr.mxu0 0.0
  %165 = vmatpush1.msra.mxu0 %v126
  %166 = vmatprep.subr.mxu0 0.0
  %167 = vmatpush1.msra.mxu0 %v125
  %168 = vmatprep.subr.mxu0 0.0
  %169 = vmatpush1.msra.mxu0 %v124
  %170 = vmatprep.subr.mxu0 0.0
  %171 = vmatpush1.msra.mxu0 %v123
  %172 = vmatprep.subr.mxu0 0.0
  %173 = vmatpush1.msra.mxu0 %v122
  %174 = vmatprep.subr.mxu0 0.0
  %175 = vmatpush1.msra.mxu0 %v121
  %176 = vmatprep.subr.mxu0 0.0
  %177 = vmatpush2.msra.mxu0 0.0
  %178 = vmatprep.subr.mxu0 0.0
  %179 = vmatpush2.msra.mxu0 0.0
  %180 = vmatprep.subr.mxu0 0.0
  %181 = vmatpush2.msra.mxu0 0.0
  %182 = vmatprep.subr.mxu0 0.0
  %183 = vmatpush2.msra.mxu0 0.0
  %184 = vmatprep.subr.mxu0 0.0
  %185 = vmatpush2.msra.mxu0 0.0
  %186 = vmatprep.subr.mxu0 0.0
  %187 = vmatpush2.msra.mxu0 0.0
  %188 = vmatprep.subr.mxu0 0.0
  %189 = vmatpush2.msra.mxu0 0.0
  %190 = vmatprep.subr.mxu0 0.0
  %191 = vmatpush2.msra.mxu0 0.0
  %192 = vmatprep.subr.mxu0 0.0
  %193 = vmatpush2.msra.mxu0 0.0
  %194 = vmatprep.subr.mxu0 0.0
  %195 = vmatpush2.msra.mxu0 0.0
  %196 = vmatprep.subr.mxu0 0.0
  %197 = vmatpush2.msra.mxu0 0.0
  %198 = vmatprep.subr.mxu0 0.0
  %199 = vmatpush2.msra.mxu0 0.0
  %200 = vmatprep.subr.mxu0 0.0
  %201 = vmatpush2.msra.mxu0 0.0
  %202 = vmatprep.subr.mxu0 0.0
  %203 = vmatpush2.msra.mxu0 0.0
  %204 = vmatprep.subr.mxu0 0.0
  %205 = vmatpush2.msra.mxu0 0.0
  %206 = vmatprep.subr.mxu0 0.0
  %207 = vmatpush2.msra.mxu0 0.0
  %208 = vmatprep.mubr.f32.mxu0 0.0
  %209 = vmatmul.mubr.f32.gmra.mxu0 %v120
  %v210 = vpop.f32.mrf.mxu0
  %v211 = vadd.f32 %v142, %v210
  %v212 = vpop.f32.mrf.mxu0
  %213 = vdwg.mxu0
  %v214 = vmax.f32 %v211, 0.0
  %v215 = vld [vmem:[%s5] sm:$0xff]
  %v216 = vld [vmem:[%s5 + $0x8] sm:$0xff]
  %v217 = vld [vmem:[%s5 + $0x10] sm:$0xff]
  %v218 = vld [vmem:[%s5 + $0x18] sm:$0xff]
  %v219 = vld [vmem:[%s5 + $0x20] sm:$0xff]
  %v220 = vld [vmem:[%s5 + $0x28] sm:$0xff]
  %v221 = vld [vmem:[%s5 + $0x30] sm:$0xff]
  %v222 = vld [vmem:[%s5 + $0x38] sm:$0xff]
  %v223 = vld [vmem:[%s5 + $0x40] sm:$0xff]
  %v224 = vld [vmem:[%s5 + $0x48] sm:$0xff]
  %v225 = vld [vmem:[%s5 + $0x50] sm:$0xff]
  %v226 = vld [vmem:[%s5 + $0x58] sm:$0xff]
  %v227 = vld [vmem:[%s5 + $0x60] sm:$0xff]
  %v228 = vld [vmem:[%s5 + $0x68] sm:$0xff]
  %v229 = vld [vmem:[%s5 + $0x70] sm:$0xff]
  %v230 = vld [vmem:[%s5 + $0x78] sm:$0xff]
  %v231 = vld [vmem:[%s6] sm:$0x1]
  %v233 = vlaneseq
  %v234 = vshrl.u32 %v233, 7
  %v235 = vsub.s32 0, %v234
  %v236 = vrot.slane %v231, %v235
  %238 = vmatprep.subr.mxu0 0.0
  %239 = vmatpush1.msra.mxu0 %v230
  %240 = vmatprep.subr.mxu0 0.0
  %241 = vmatpush1.msra.mxu0 %v229
  %242 = vmatprep.subr.mxu0 0.0
  %243 = vmatpush1.msra.mxu0 %v228
  %244 = vmatprep.subr.mxu0 0.0
  %245 = vmatpush1.msra.mxu0 %v227
  %246 = vmatprep.subr.mxu0 0.0
  %247 = vmatpush1.msra.mxu0 %v226
  %248 = vmatprep.subr.mxu0 0.0
  %249 = vmatpush1.msra.mxu0 %v225
  %250 = vmatprep.subr.mxu0 0.0
  %251 = vmatpush1.msra.mxu0 %v224
  %252 = vmatprep.subr.mxu0 0.0
  %253 = vmatpush1.msra.mxu0 %v223
  %254 = vmatprep.subr.mxu0 0.0
  %255 = vmatpush1.msra.mxu0 %v222
  %256 = vmatprep.subr.mxu0 0.0
  %257 = vmatpush1.msra.mxu0 %v221
  %258 = vmatprep.subr.mxu0 0.0
  %259 = vmatpush1.msra.mxu0 %v220
  %260 = vmatprep.subr.mxu0 0.0
  %261 = vmatpush1.msra.mxu0 %v219
  %262 = vmatprep.subr.mxu0 0.0
  %263 = vmatpush1.msra.mxu0 %v218
  %264 = vmatprep.subr.mxu0 0.0
  %265 = vmatpush1.msra.mxu0 %v217
  %266 = vmatprep.subr.mxu0 0.0
  %267 = vmatpush1.msra.mxu0 %v216
  %268 = vmatprep.subr.mxu0 0.0
  %269 = vmatpush1.msra.mxu0 %v215
  %270 = vmatprep.subr.mxu0 0.0
  %271 = vmatpush2.msra.mxu0 0.0
  %272 = vmatprep.subr.mxu0 0.0
  %273 = vmatpush2.msra.mxu0 0.0
  %274 = vmatprep.subr.mxu0 0.0
  %275 = vmatpush2.msra.mxu0 0.0
  %276 = vmatprep.subr.mxu0 0.0
  %277 = vmatpush2.msra.mxu0 0.0
  %278 = vmatprep.subr.mxu0 0.0
  %279 = vmatpush2.msra.mxu0 0.0
  %280 = vmatprep.subr.mxu0 0.0
  %281 = vmatpush2.msra.mxu0 0.0
  %282 = vmatprep.subr.mxu0 0.0
  %283 = vmatpush2.msra.mxu0 0.0
  %284 = vmatprep.subr.mxu0 0.0
  %285 = vmatpush2.msra.mxu0 0.0
  %286 = vmatprep.subr.mxu0 0.0
  %287 = vmatpush2.msra.mxu0 0.0
  %288 = vmatprep.subr.mxu0 0.0
  %289 = vmatpush2.msra.mxu0 0.0
  %290 = vmatprep.subr.mxu0 0.0
  %291 = vmatpush2.msra.mxu0 0.0
  %292 = vmatprep.subr.mxu0 0.0
  %293 = vmatpush2.msra.mxu0 0.0
  %294 = vmatprep.subr.mxu0 0.0
  %295 = vmatpush2.msra.mxu0 0.0
  %296 = vmatprep.subr.mxu0 0.0
  %297 = vmatpush2.msra.mxu0 0.0
  %298 = vmatprep.subr.mxu0 0.0
  %299 = vmatpush2.msra.mxu0 0.0
  %300 = vmatprep.subr.mxu0 0.0
  %301 = vmatpush2.msra.mxu0 0.0
  %302 = vmatprep.mubr.f32.mxu0 0.0
  %303 = vmatmul.mubr.f32.gmra.mxu0 %v214
  %v304 = vpop.f32.mrf.mxu0
  %v305 = vadd.f32 %v236, %v304
  %v306 = vpop.f32.mrf.mxu0
  %307 = vdwg.mxu0
  %308 = vst [vmem:[%s7] sm:$0xff] %v305
  // Predicated region
  $region30: #{dqn_forward.1} parent=0 // pred_check
    _
  $region31: #{dqn_forward.1} parent=0 // pred_check_branch
    %310 = sbr.rel (0) target = $region33
  $region32: #{dqn_forward.1} parent=0 // pred_region
    _
  $region33: #{dqn_forward.1} parent=0 // pred_fallthru
    _
  // Predicated region
  $region34: #{dqn_forward.1} parent=0 // pred_check
    _
  $region35: #{dqn_forward.1} parent=0 // pred_check_branch
    %312 = sbr.rel (0) target = $region37
  $region36: #{dqn_forward.1} parent=0 // pred_region
    _
  $region37: #{dqn_forward.1} parent=0 // pred_fallthru
    _

</llo_original>
